<compile_context>
chip_gen: v5e
topology: v5e:2x2
jax: 0.10.0
libtpu: 0.0.40
codegen_flags: <defaults>
</compile_context>

<pallas_src>
import numpy as np
import jax
import jax.numpy as jnp
from jax.experimental import pallas as pl
from jax.experimental.pallas import tpu as pltpu


def _round_up(n, m):
    return ((n + m - 1) // m) * m


def rnn_fused_kernel(x_ref, h0_ref, w_ih_ref, w_hh_ref, b_ref, w_fc_ref, b_fc_ref,
                     y_ref, hn_ref, xw_ref, hall_ref):
    """Fused RNN forward, single invocation.

    x_ref   : (T*Bp, Ip)  time-major, padded, flattened inputs
    h0_ref  : (Bp, Hp)    initial hidden state (padded)
    w_*_ref : padded, pre-transposed weights; b_ref = b_ih + b_hh
    y_ref   : (T*Bp, Op)  FC output (padded)
    hn_ref  : (Bp, Hp)    final hidden state (padded)
    xw_ref, hall_ref : VMEM scratch (T*Bp, Hp)
    """
    Bp = h0_ref.shape[0]
    TB, Hp = xw_ref.shape
    T = TB // Bp

    # (1) Hoisted input projection: one MXU matmul covering all timesteps.
    xw_ref[...] = (jnp.dot(x_ref[...], w_ih_ref[...],
                           preferred_element_type=jnp.float32)
                   + b_ref[...])

    # (2) Serial recurrence: only h @ W_hh + tanh per step.
    w_hh = w_hh_ref[...]

    def step(t, h):
        row = pl.multiple_of(t * Bp, Bp)
        pre = xw_ref[pl.ds(row, Bp), :] + jnp.dot(
            h, w_hh, preferred_element_type=jnp.float32)
        h_new = jnp.tanh(pre)
        hall_ref[pl.ds(row, Bp), :] = h_new
        return h_new

    h_last = jax.lax.fori_loop(0, T, step, h0_ref[...], unroll=True)
    hn_ref[...] = h_last

    # (3) Hoisted FC head: one batched matmul, lane-dense (Op=128*k) store.
    y_ref[...] = (jnp.dot(hall_ref[...], w_fc_ref[...],
                          preferred_element_type=jnp.float32)
                  + b_fc_ref[...])


def simple_rnn_forward(x, params, h0=None):
    """x: (B, T, I) float32.  Returns (y, hn) with y: (B, T, O), hn: (1, B, H)."""
    w_ih, w_hh, b_ih, b_hh, w_fc, b_fc = params
    B, T, I = x.shape
    H = w_ih.shape[0]
    O = w_fc.shape[0]
    f32 = jnp.float32

    # Pad to vreg tiling: batch -> sublane multiple (8), feature dims -> lane
    # multiple (128).  Padding is done once here, not per step.
    Bp = _round_up(B, 8)
    Ip = _round_up(I, 128)
    Hp = _round_up(H, 128)
    Op = _round_up(O, 128)

    h0_2d = jnp.zeros((B, H), f32) if h0 is None else h0[0].astype(f32)

    # Time-major + pad + flatten (the transpose fuses into the padding copy).
    x_tm = jnp.transpose(x.astype(f32), (1, 0, 2))                    # (T, B, I)
    x_flat = jnp.zeros((T, Bp, Ip), f32).at[:, :B, :I].set(x_tm).reshape(T * Bp, Ip)

    h0_pad = jnp.zeros((Bp, Hp), f32).at[:B, :H].set(h0_2d)
    w_ih_p = jnp.zeros((Ip, Hp), f32).at[:I, :H].set(w_ih.T.astype(f32))
    w_hh_p = jnp.zeros((Hp, Hp), f32).at[:H, :H].set(w_hh.T.astype(f32))
    b_p    = jnp.zeros((1, Hp), f32).at[0, :H].set((b_ih + b_hh).astype(f32))
    w_fc_p = jnp.zeros((Hp, Op), f32).at[:H, :O].set(w_fc.T.astype(f32))
    b_fc_p = jnp.zeros((1, Op), f32).at[0, :O].set(b_fc.astype(f32))

    def full(shape):
        return pl.BlockSpec(shape, lambda i, _s=shape: tuple(0 for _ in _s))

    y_flat, hn_pad = pl.pallas_call(
        rnn_fused_kernel,
        out_shape=(
            jax.ShapeDtypeStruct((T * Bp, Op), f32),
            jax.ShapeDtypeStruct((Bp, Hp), f32),
        ),
        grid_spec=pltpu.PrefetchScalarGridSpec(
            num_scalar_prefetch=0,
            grid=(1,),                                # single invocation
            in_specs=[
                full((T * Bp, Ip)),    # x (time-major, flattened, padded)
                full((Bp, Hp)),        # h0
                full((Ip, Hp)),        # W_ih^T
                full((Hp, Hp)),        # W_hh^T
                full((1, Hp)),         # b_ih + b_hh
                full((Hp, Op)),        # W_fc^T
                full((1, Op)),         # b_fc
            ],
            out_specs=[
                full((T * Bp, Op)),    # y (all timesteps)
                full((Bp, Hp)),        # hn
            ],
            scratch_shapes=[
                pltpu.VMEM((T * Bp, Hp), f32),   # hoisted input projection
                pltpu.VMEM((T * Bp, Hp), f32),   # all hidden states for FC head
            ],
        ),
        compiler_params=pltpu.CompilerParams(
            dimension_semantics=("arbitrary",)),      # recurrence is serial
    )(x_flat, h0_pad, w_ih_p, w_hh_p, b_p, w_fc_p, b_fc_p)

    # Un-pad / restore batch_first layout.
    y = y_flat.reshape(T, Bp, Op)[:, :B, :O].transpose(1, 0, 2)   # (B, T, O)
    hn = hn_pad[:B, :H].reshape(1, B, H)
    return y, hn


def init_params(key, input_size=3, hidden_size=100, output_size=3):
    """Deterministic PyTorch-style init: U(-1/sqrt(fan), 1/sqrt(fan))."""
    ks = jax.random.split(key, 6)
    k_rnn = 1.0 / np.sqrt(hidden_size)
    k_fc = 1.0 / np.sqrt(hidden_size)
    w_ih = jax.random.uniform(ks[0], (hidden_size, input_size), jnp.float32, -k_rnn, k_rnn)
    w_hh = jax.random.uniform(ks[1], (hidden_size, hidden_size), jnp.float32, -k_rnn, k_rnn)
    b_ih = jax.random.uniform(ks[2], (hidden_size,), jnp.float32, -k_rnn, k_rnn)
    b_hh = jax.random.uniform(ks[3], (hidden_size,), jnp.float32, -k_rnn, k_rnn)
    w_fc = jax.random.uniform(ks[4], (output_size, hidden_size), jnp.float32, -k_fc, k_fc)
    b_fc = jax.random.uniform(ks[5], (output_size,), jnp.float32, -k_fc, k_fc)
    return (w_ih, w_hh, b_ih, b_hh, w_fc, b_fc)


def reference_forward(x, params, h0=None):
    """Pure-JAX reference of nn.RNN(batch_first) + nn.Linear for verification."""
    w_ih, w_hh, b_ih, b_hh, w_fc, b_fc = params
    B, T, I = x.shape
    H = w_ih.shape[0]
    h = jnp.zeros((B, H), jnp.float32) if h0 is None else h0[0]
    xt = jnp.transpose(x, (1, 0, 2))

    def step(h, x_t):
        h_new = jnp.tanh(x_t @ w_ih.T + b_ih + h @ w_hh.T + b_hh)
        return h_new, h_new

    hn, out_t = jax.lax.scan(step, h, xt)
    out = jnp.transpose(out_t, (1, 0, 2))
    y = out @ w_fc.T + b_fc
    return y, hn[None]


if __name__ == "__main__":
    key = jax.random.PRNGKey(0)
    k_x, k_p = jax.random.split(key)

    B, T, I, H, O = 2, 8, 3, 100, 3
    x = jax.random.normal(k_x, (B, T, I), jnp.float32)
    params = init_params(k_p, input_size=I, hidden_size=H, output_size=O)

    y, hn = simple_rnn_forward(x, params)
    y = jax.block_until_ready(y)
    hn = jax.block_until_ready(hn)

    y_ref, hn_ref = reference_forward(x, params)
    np.testing.assert_allclose(np.asarray(y), np.asarray(y_ref), rtol=1e-5, atol=1e-5)
    np.testing.assert_allclose(np.asarray(hn), np.asarray(hn_ref), rtol=1e-5, atol=1e-5)

    assert y.shape == (B, T, O) and hn.shape == (1, B, H)
    print("KERNEL_OK")
</pallas_src>

<mosaic_0001>
module attributes {stable_mosaic.version = 11 : i64} {
  func.func @rnn_fused_kernel(%arg0: i32, %arg1: memref<64x128xf32, #tpu.memory_space<vmem>>, %arg2: memref<8x128xf32, #tpu.memory_space<vmem>>, %arg3: memref<128x128xf32, #tpu.memory_space<vmem>>, %arg4: memref<128x128xf32, #tpu.memory_space<vmem>>, %arg5: memref<1x128xf32, #tpu.memory_space<vmem>>, %arg6: memref<128x128xf32, #tpu.memory_space<vmem>>, %arg7: memref<1x128xf32, #tpu.memory_space<vmem>>, %arg8: memref<64x128xf32, #tpu.memory_space<vmem>>, %arg9: memref<8x128xf32, #tpu.memory_space<vmem>>, %arg10: memref<64x128xf32, #tpu.memory_space<vmem>>, %arg11: memref<64x128xf32, #tpu.memory_space<vmem>>) attributes {dimension_semantics = [#tpu.dimension_semantics<arbitrary>], iteration_bounds = array<i64: 1>, scalar_prefetch = 0 : i64, scratch_operands = 2 : i64, tpu.core_type = #tpu.core_type<tc>, window_params = [{pipeline_mode = #tpu.pipeline_mode<synchronous>, transform_indices = @transform_0, window_bounds = array<i64: 64, 128>}, {pipeline_mode = #tpu.pipeline_mode<synchronous>, transform_indices = @transform_1, window_bounds = array<i64: 8, 128>}, {pipeline_mode = #tpu.pipeline_mode<synchronous>, transform_indices = @transform_2, window_bounds = array<i64: 128, 128>}, {pipeline_mode = #tpu.pipeline_mode<synchronous>, transform_indices = @transform_3, window_bounds = array<i64: 128, 128>}, {pipeline_mode = #tpu.pipeline_mode<synchronous>, transform_indices = @transform_4, window_bounds = array<i64: 1, 128>}, {pipeline_mode = #tpu.pipeline_mode<synchronous>, transform_indices = @transform_5, window_bounds = array<i64: 128, 128>}, {pipeline_mode = #tpu.pipeline_mode<synchronous>, transform_indices = @transform_6, window_bounds = array<i64: 1, 128>}, {pipeline_mode = #tpu.pipeline_mode<synchronous>, transform_indices = @transform_7, window_bounds = array<i64: 64, 128>}, {pipeline_mode = #tpu.pipeline_mode<synchronous>, transform_indices = @transform_8, window_bounds = array<i64: 8, 128>}]} {
    %c0 = arith.constant 0 : index
    %c0_0 = arith.constant 0 : index
    %0 = vector.load %arg1[%c0, %c0_0] : memref<64x128xf32, #tpu.memory_space<vmem>>, vector<64x128xf32>
    %c0_1 = arith.constant 0 : index
    %c0_2 = arith.constant 0 : index
    %1 = vector.load %arg3[%c0_1, %c0_2] : memref<128x128xf32, #tpu.memory_space<vmem>>, vector<128x128xf32>
    %cst = arith.constant dense<0.000000e+00> : vector<64x128xf32>
    %2 = tpu.matmul %0, %1, %cst {dimension_numbers = #tpu.dot_dimension_numbers<[1], [0], [0], [1], [0, 0, 1, 1], [], []>} : vector<64x128xf32>, vector<128x128xf32>, vector<64x128xf32> -> vector<64x128xf32>
    %c0_3 = arith.constant 0 : index
    %c0_4 = arith.constant 0 : index
    %3 = vector.load %arg5[%c0_3, %c0_4] : memref<1x128xf32, #tpu.memory_space<vmem>>, vector<1x128xf32>
    %4 = vector.broadcast %3 : vector<1x128xf32> to vector<64x128xf32>
    %5 = arith.addf %2, %4 : vector<64x128xf32>
    %c0_5 = arith.constant 0 : index
    %c0_6 = arith.constant 0 : index
    %6 = vector.load %arg10[%c0_5, %c0_6] : memref<64x128xf32, #tpu.memory_space<vmem>>, vector<64x128xf32>
    tpu.vector_store %arg10[%c0_5, %c0_6], %5 {strides = array<i32>} : memref<64x128xf32, #tpu.memory_space<vmem>>, vector<64x128xf32>,
    %c0_7 = arith.constant 0 : index
    %c0_8 = arith.constant 0 : index
    %7 = vector.load %arg4[%c0_7, %c0_8] : memref<128x128xf32, #tpu.memory_space<vmem>>, vector<128x128xf32>
    %c0_9 = arith.constant 0 : index
    %c0_10 = arith.constant 0 : index
    %8 = vector.load %arg2[%c0_9, %c0_10] : memref<8x128xf32, #tpu.memory_space<vmem>>, vector<8x128xf32>
    %c0_i32 = arith.constant 0 : i32
    %c8_i32 = arith.constant 8 : i32
    %9 = arith.muli %c0_i32, %c8_i32 : i32
    %10 = tpu.assume_multiple %9, 8 : i32
    %11 = arith.index_cast %10 : i32 to index
    %c0_11 = arith.constant 0 : index
    %12 = vector.load %arg10[%11, %c0_11] : memref<64x128xf32, #tpu.memory_space<vmem>>, vector<8x128xf32>
    %cst_12 = arith.constant dense<0.000000e+00> : vector<8x128xf32>
    %13 = tpu.matmul %8, %7, %cst_12 {dimension_numbers = #tpu.dot_dimension_numbers<[1], [0], [0], [1], [0, 0, 1, 1], [], []>} : vector<8x128xf32>, vector<128x128xf32>, vector<8x128xf32> -> vector<8x128xf32>
    %14 = arith.addf %12, %13 : vector<8x128xf32>
    %15 = math.tanh %14 : vector<8x128xf32>
    %16 = arith.index_cast %10 : i32 to index
    %c0_13 = arith.constant 0 : index
    %17 = vector.load %arg11[%16, %c0_13] : memref<64x128xf32, #tpu.memory_space<vmem>>, vector<8x128xf32>
    tpu.vector_store %arg11[%16, %c0_13], %15 {strides = array<i32>} : memref<64x128xf32, #tpu.memory_space<vmem>>, vector<8x128xf32>,
    %c1_i32 = arith.constant 1 : i32
    %c8_i32_14 = arith.constant 8 : i32
    %18 = arith.muli %c1_i32, %c8_i32_14 : i32
    %19 = tpu.assume_multiple %18, 8 : i32
    %20 = arith.index_cast %19 : i32 to index
    %c0_15 = arith.constant 0 : index
    %21 = vector.load %arg10[%20, %c0_15] : memref<64x128xf32, #tpu.memory_space<vmem>>, vector<8x128xf32>
    %cst_16 = arith.constant dense<0.000000e+00> : vector<8x128xf32>
    %22 = tpu.matmul %15, %7, %cst_16 {dimension_numbers = #tpu.dot_dimension_numbers<[1], [0], [0], [1], [0, 0, 1, 1], [], []>} : vector<8x128xf32>, vector<128x128xf32>, vector<8x128xf32> -> vector<8x128xf32>
    %23 = arith.addf %21, %22 : vector<8x128xf32>
    %24 = math.tanh %23 : vector<8x128xf32>
    %25 = arith.index_cast %19 : i32 to index
    %c0_17 = arith.constant 0 : index
    %26 = vector.load %arg11[%25, %c0_17] : memref<64x128xf32, #tpu.memory_space<vmem>>, vector<8x128xf32>
    tpu.vector_store %arg11[%25, %c0_17], %24 {strides = array<i32>} : memref<64x128xf32, #tpu.memory_space<vmem>>, vector<8x128xf32>,
    %c2_i32 = arith.constant 2 : i32
    %c8_i32_18 = arith.constant 8 : i32
    %27 = arith.muli %c2_i32, %c8_i32_18 : i32
    %28 = tpu.assume_multiple %27, 8 : i32
    %29 = arith.index_cast %28 : i32 to index
    %c0_19 = arith.constant 0 : index
    %30 = vector.load %arg10[%29, %c0_19] : memref<64x128xf32, #tpu.memory_space<vmem>>, vector<8x128xf32>
    %cst_20 = arith.constant dense<0.000000e+00> : vector<8x128xf32>
    %31 = tpu.matmul %24, %7, %cst_20 {dimension_numbers = #tpu.dot_dimension_numbers<[1], [0], [0], [1], [0, 0, 1, 1], [], []>} : vector<8x128xf32>, vector<128x128xf32>, vector<8x128xf32> -> vector<8x128xf32>
    %32 = arith.addf %30, %31 : vector<8x128xf32>
    %33 = math.tanh %32 : vector<8x128xf32>
    %34 = arith.index_cast %28 : i32 to index
    %c0_21 = arith.constant 0 : index
    %35 = vector.load %arg11[%34, %c0_21] : memref<64x128xf32, #tpu.memory_space<vmem>>, vector<8x128xf32>
    tpu.vector_store %arg11[%34, %c0_21], %33 {strides = array<i32>} : memref<64x128xf32, #tpu.memory_space<vmem>>, vector<8x128xf32>,
    %c3_i32 = arith.constant 3 : i32
    %c8_i32_22 = arith.constant 8 : i32
    %36 = arith.muli %c3_i32, %c8_i32_22 : i32
    %37 = tpu.assume_multiple %36, 8 : i32
    %38 = arith.index_cast %37 : i32 to index
    %c0_23 = arith.constant 0 : index
    %39 = vector.load %arg10[%38, %c0_23] : memref<64x128xf32, #tpu.memory_space<vmem>>, vector<8x128xf32>
    %cst_24 = arith.constant dense<0.000000e+00> : vector<8x128xf32>
    %40 = tpu.matmul %33, %7, %cst_24 {dimension_numbers = #tpu.dot_dimension_numbers<[1], [0], [0], [1], [0, 0, 1, 1], [], []>} : vector<8x128xf32>, vector<128x128xf32>, vector<8x128xf32> -> vector<8x128xf32>
    %41 = arith.addf %39, %40 : vector<8x128xf32>
    %42 = math.tanh %41 : vector<8x128xf32>
    %43 = arith.index_cast %37 : i32 to index
    %c0_25 = arith.constant 0 : index
    %44 = vector.load %arg11[%43, %c0_25] : memref<64x128xf32, #tpu.memory_space<vmem>>, vector<8x128xf32>
    tpu.vector_store %arg11[%43, %c0_25], %42 {strides = array<i32>} : memref<64x128xf32, #tpu.memory_space<vmem>>, vector<8x128xf32>,
    %c4_i32 = arith.constant 4 : i32
    %c8_i32_26 = arith.constant 8 : i32
    %45 = arith.muli %c4_i32, %c8_i32_26 : i32
    %46 = tpu.assume_multiple %45, 8 : i32
    %47 = arith.index_cast %46 : i32 to index
    %c0_27 = arith.constant 0 : index
    %48 = vector.load %arg10[%47, %c0_27] : memref<64x128xf32, #tpu.memory_space<vmem>>, vector<8x128xf32>
    %cst_28 = arith.constant dense<0.000000e+00> : vector<8x128xf32>
    %49 = tpu.matmul %42, %7, %cst_28 {dimension_numbers = #tpu.dot_dimension_numbers<[1], [0], [0], [1], [0, 0, 1, 1], [], []>} : vector<8x128xf32>, vector<128x128xf32>, vector<8x128xf32> -> vector<8x128xf32>
    %50 = arith.addf %48, %49 : vector<8x128xf32>
    %51 = math.tanh %50 : vector<8x128xf32>
    %52 = arith.index_cast %46 : i32 to index
    %c0_29 = arith.constant 0 : index
    %53 = vector.load %arg11[%52, %c0_29] : memref<64x128xf32, #tpu.memory_space<vmem>>, vector<8x128xf32>
    tpu.vector_store %arg11[%52, %c0_29], %51 {strides = array<i32>} : memref<64x128xf32, #tpu.memory_space<vmem>>, vector<8x128xf32>,
    %c5_i32 = arith.constant 5 : i32
    %c8_i32_30 = arith.constant 8 : i32
    %54 = arith.muli %c5_i32, %c8_i32_30 : i32
    %55 = tpu.assume_multiple %54, 8 : i32
    %56 = arith.index_cast %55 : i32 to index
    %c0_31 = arith.constant 0 : index
    %57 = vector.load %arg10[%56, %c0_31] : memref<64x128xf32, #tpu.memory_space<vmem>>, vector<8x128xf32>
    %cst_32 = arith.constant dense<0.000000e+00> : vector<8x128xf32>
    %58 = tpu.matmul %51, %7, %cst_32 {dimension_numbers = #tpu.dot_dimension_numbers<[1], [0], [0], [1], [0, 0, 1, 1], [], []>} : vector<8x128xf32>, vector<128x128xf32>, vector<8x128xf32> -> vector<8x128xf32>
    %59 = arith.addf %57, %58 : vector<8x128xf32>
    %60 = math.tanh %59 : vector<8x128xf32>
    %61 = arith.index_cast %55 : i32 to index
    %c0_33 = arith.constant 0 : index
    %62 = vector.load %arg11[%61, %c0_33] : memref<64x128xf32, #tpu.memory_space<vmem>>, vector<8x128xf32>
    tpu.vector_store %arg11[%61, %c0_33], %60 {strides = array<i32>} : memref<64x128xf32, #tpu.memory_space<vmem>>, vector<8x128xf32>,
    %c6_i32 = arith.constant 6 : i32
    %c8_i32_34 = arith.constant 8 : i32
    %63 = arith.muli %c6_i32, %c8_i32_34 : i32
    %64 = tpu.assume_multiple %63, 8 : i32
    %65 = arith.index_cast %64 : i32 to index
    %c0_35 = arith.constant 0 : index
    %66 = vector.load %arg10[%65, %c0_35] : memref<64x128xf32, #tpu.memory_space<vmem>>, vector<8x128xf32>
    %cst_36 = arith.constant dense<0.000000e+00> : vector<8x128xf32>
    %67 = tpu.matmul %60, %7, %cst_36 {dimension_numbers = #tpu.dot_dimension_numbers<[1], [0], [0], [1], [0, 0, 1, 1], [], []>} : vector<8x128xf32>, vector<128x128xf32>, vector<8x128xf32> -> vector<8x128xf32>
    %68 = arith.addf %66, %67 : vector<8x128xf32>
    %69 = math.tanh %68 : vector<8x128xf32>
    %70 = arith.index_cast %64 : i32 to index
    %c0_37 = arith.constant 0 : index
    %71 = vector.load %arg11[%70, %c0_37] : memref<64x128xf32, #tpu.memory_space<vmem>>, vector<8x128xf32>
    tpu.vector_store %arg11[%70, %c0_37], %69 {strides = array<i32>} : memref<64x128xf32, #tpu.memory_space<vmem>>, vector<8x128xf32>,
    %c7_i32 = arith.constant 7 : i32
    %c8_i32_38 = arith.constant 8 : i32
    %72 = arith.muli %c7_i32, %c8_i32_38 : i32
    %73 = tpu.assume_multiple %72, 8 : i32
    %74 = arith.index_cast %73 : i32 to index
    %c0_39 = arith.constant 0 : index
    %75 = vector.load %arg10[%74, %c0_39] : memref<64x128xf32, #tpu.memory_space<vmem>>, vector<8x128xf32>
    %cst_40 = arith.constant dense<0.000000e+00> : vector<8x128xf32>
    %76 = tpu.matmul %69, %7, %cst_40 {dimension_numbers = #tpu.dot_dimension_numbers<[1], [0], [0], [1], [0, 0, 1, 1], [], []>} : vector<8x128xf32>, vector<128x128xf32>, vector<8x128xf32> -> vector<8x128xf32>
    %77 = arith.addf %75, %76 : vector<8x128xf32>
    %78 = math.tanh %77 : vector<8x128xf32>
    %79 = arith.index_cast %73 : i32 to index
    %c0_41 = arith.constant 0 : index
    %80 = vector.load %arg11[%79, %c0_41] : memref<64x128xf32, #tpu.memory_space<vmem>>, vector<8x128xf32>
    tpu.vector_store %arg11[%79, %c0_41], %78 {strides = array<i32>} : memref<64x128xf32, #tpu.memory_space<vmem>>, vector<8x128xf32>,
    %c8_i32_42 = arith.constant 8 : i32
    %c0_43 = arith.constant 0 : index
    %c0_44 = arith.constant 0 : index
    %81 = vector.load %arg9[%c0_43, %c0_44] : memref<8x128xf32, #tpu.memory_space<vmem>>, vector<8x128xf32>
    tpu.vector_store %arg9[%c0_43, %c0_44], %78 {strides = array<i32>} : memref<8x128xf32, #tpu.memory_space<vmem>>, vector<8x128xf32>,
    %c0_45 = arith.constant 0 : index
    %c0_46 = arith.constant 0 : index
    %82 = vector.load %arg11[%c0_45, %c0_46] : memref<64x128xf32, #tpu.memory_space<vmem>>, vector<64x128xf32>
    %c0_47 = arith.constant 0 : index
    %c0_48 = arith.constant 0 : index
    %83 = vector.load %arg6[%c0_47, %c0_48] : memref<128x128xf32, #tpu.memory_space<vmem>>, vector<128x128xf32>
    %cst_49 = arith.constant dense<0.000000e+00> : vector<64x128xf32>
    %84 = tpu.matmul %82, %83, %cst_49 {dimension_numbers = #tpu.dot_dimension_numbers<[1], [0], [0], [1], [0, 0, 1, 1], [], []>} : vector<64x128xf32>, vector<128x128xf32>, vector<64x128xf32> -> vector<64x128xf32>
    %c0_50 = arith.constant 0 : index
    %c0_51 = arith.constant 0 : index
    %85 = vector.load %arg7[%c0_50, %c0_51] : memref<1x128xf32, #tpu.memory_space<vmem>>, vector<1x128xf32>
    %86 = vector.broadcast %85 : vector<1x128xf32> to vector<64x128xf32>
    %87 = arith.addf %84, %86 : vector<64x128xf32>
    %c0_52 = arith.constant 0 : index
    %c0_53 = arith.constant 0 : index
    %88 = vector.load %arg8[%c0_52, %c0_53] : memref<64x128xf32, #tpu.memory_space<vmem>>, vector<64x128xf32>
    tpu.vector_store %arg8[%c0_52, %c0_53], %87 {strides = array<i32>} : memref<64x128xf32, #tpu.memory_space<vmem>>, vector<64x128xf32>,
    return
  }
  func.func @transform_0(%arg0: i32) -> (i32, i32) {
    %c0_i32 = arith.constant 0 : i32
    %c0_i32_0 = arith.constant 0 : i32
    %c0_i32_1 = arith.constant 0 : i32
    return %c0_i32, %c0_i32_0 : i32, i32
  }
  func.func @transform_1(%arg0: i32) -> (i32, i32) {
    %c0_i32 = arith.constant 0 : i32
    %c0_i32_0 = arith.constant 0 : i32
    %c0_i32_1 = arith.constant 0 : i32
    return %c0_i32, %c0_i32_0 : i32, i32
  }
  func.func @transform_2(%arg0: i32) -> (i32, i32) {
    %c0_i32 = arith.constant 0 : i32
    %c0_i32_0 = arith.constant 0 : i32
    %c0_i32_1 = arith.constant 0 : i32
    return %c0_i32, %c0_i32_0 : i32, i32
  }
  func.func @transform_3(%arg0: i32) -> (i32, i32) {
    %c0_i32 = arith.constant 0 : i32
    %c0_i32_0 = arith.constant 0 : i32
    %c0_i32_1 = arith.constant 0 : i32
    return %c0_i32, %c0_i32_0 : i32, i32
  }
  func.func @transform_4(%arg0: i32) -> (i32, i32) {
    %c0_i32 = arith.constant 0 : i32
    %c0_i32_0 = arith.constant 0 : i32
    %c0_i32_1 = arith.constant 0 : i32
    return %c0_i32, %c0_i32_0 : i32, i32
  }
  func.func @transform_5(%arg0: i32) -> (i32, i32) {
    %c0_i32 = arith.constant 0 : i32
    %c0_i32_0 = arith.constant 0 : i32
    %c0_i32_1 = arith.constant 0 : i32
    return %c0_i32, %c0_i32_0 : i32, i32
  }
  func.func @transform_6(%arg0: i32) -> (i32, i32) {
    %c0_i32 = arith.constant 0 : i32
    %c0_i32_0 = arith.constant 0 : i32
    %c0_i32_1 = arith.constant 0 : i32
    return %c0_i32, %c0_i32_0 : i32, i32
  }
  func.func @transform_7(%arg0: i32) -> (i32, i32) {
    %c0_i32 = arith.constant 0 : i32
    %c0_i32_0 = arith.constant 0 : i32
    %c0_i32_1 = arith.constant 0 : i32
    return %c0_i32, %c0_i32_0 : i32, i32
  }
  func.func @transform_8(%arg0: i32) -> (i32, i32) {
    %c0_i32 = arith.constant 0 : i32
    %c0_i32_0 = arith.constant 0 : i32
    %c0_i32_1 = arith.constant 0 : i32
    return %c0_i32, %c0_i32_0 : i32, i32
  }
}

</mosaic_0001>

<llo_original>
// kernel: tpu_custom_call.1
$region0: #{tpu_custom_call.1}
  #allocation0 [shape = 'u32[]', space=smem, size = 0x4, offset = 0x4, fixed_abs, tag = 'smem constant byte address 0x4 - core index']
  #allocation1 [shape = 'u32[72,128]{1,0:T(1,128)}', space=vmem, size = 0x9000, scoped, tag = 'internal scratch']
  #allocation2 [shape = 'f32[64,128]{1,0:T(8,128)}', space=vmem, size = 0x8000, scoped, tag = 'scratch operand']
  #allocation3 [shape = 'f32[64,128]{1,0:T(8,128)}', space=vmem, size = 0x8000, scoped, tag = 'scratch operand']
  %s0 = inlined_call_operand.hbm [shape: f32[64,128], index: 0, kind: input, shape index: {}]
  %s1 = inlined_call_operand.hbm [shape: f32[8,128], index: 1, kind: input, shape index: {}]
  %s2 = inlined_call_operand.hbm [shape: f32[128,128], index: 2, kind: input, shape index: {}]
  %s3 = inlined_call_operand.hbm [shape: f32[128,128], index: 3, kind: input, shape index: {}]
  %s4 = inlined_call_operand.vmem [shape: f32[1,128], index: 4, kind: input, shape index: {}]
  %s5 = inlined_call_operand.hbm [shape: f32[128,128], index: 5, kind: input, shape index: {}]
  %s6 = inlined_call_operand.vmem [shape: f32[1,128], index: 6, kind: input, shape index: {}]
  %s7 = inlined_call_operand.hbm [shape: f32[64,128], index: 7, kind: output, shape index: {0}]
  %s8 = inlined_call_operand.hbm [shape: f32[8,128], index: 8, kind: output, shape index: {1}]
  %9 = xla_tuple %s7, %s8
  %s10 = sld [smem:[#allocation0]]
  $region66: #{tpu_custom_call.1} parent=0
    _
  %s12 = ssub.s32 1, %s10
  %s13 = scalar_select 0, %s12, %s10
  $region1: #{tpu_custom_call.1} parent=0
    #allocation4 [shape = 'u8[32768]{0}', space=vmem, size = 0x8000, scoped, tag = 'input window, operand 0, single buffered']
    #allocation5 [shape = 's32[1]{0}', space=sflag, size = 0x4, scoped, tag = 'scoped memory for tpu_custom_call.1']
    #allocation6 [shape = 's32[1]{0}', space=sflag, size = 0x4, scoped, tag = 'scoped memory for tpu_custom_call.1']
    #allocation7 [shape = 'u8[4096]{0}', space=vmem, size = 0x1000, scoped, tag = 'input window, operand 1, single buffered']
    #allocation8 [shape = 's32[1]{0}', space=sflag, size = 0x4, scoped, tag = 'scoped memory for tpu_custom_call.1']
    #allocation9 [shape = 'u8[65536]{0}', space=vmem, size = 0x10000, scoped, tag = 'input window, operand 2, single buffered']
    #allocation10 [shape = 'u8[65536]{0}', space=vmem, size = 0x10000, scoped, tag = 'input window, operand 3, single buffered']
    #allocation11 [shape = 's32[1]{0}', space=sflag, size = 0x4, scoped, tag = 'scoped memory for tpu_custom_call.1']
    #allocation12 [shape = 'u8[65536]{0}', space=vmem, size = 0x10000, scoped, tag = 'input window, operand 5, single buffered']
    #allocation13 [shape = 'u8[32768]{0}', space=vmem, size = 0x8000, scoped, tag = 'output window, operand 0, single buffered']
    #allocation14 [shape = 'u8[4096]{0}', space=vmem, size = 0x1000, scoped, tag = 'output window, operand 1, single buffered']
    #allocation15 [shape = 's32[1]{0}', space=sflag, size = 0x4, scoped, tag = 'scoped memory for tpu_custom_call.1']
    %14 = vsyncpa [#allocation5], 0
    %15 = vsyncpa [#allocation8], 0
    %16 = vsyncpa [#allocation11], 0
    %17 = vsyncpa [#allocation6], 0
    %18 = vsyncpa [#allocation15], 0
    // Predicated region
    $region2: #{tpu_custom_call.1} parent=1 // pred_check
      _
    $region3: #{tpu_custom_call.1} parent=1 // pred_check_branch
      %20 = sbr.rel (0) target = $region5
    $region4: #{tpu_custom_call.1} parent=1 // pred_region
      %22 = vsyncadd [#allocation5], 0
      %s23 = sshll.u32 %s0, 4
      %s24 = int_to_ptr.hbm [resolvable:$true] %s23
      %s25 = sshll.u32 [#allocation4], 4
      %s26 = int_to_ptr.vmem [resolvable:$true] %s25
      %31 = dma.hbm_to_vmem [thread:$0]  %s24, 1024, %s26, [#allocation5], 128, 128, 8
    $region5: #{tpu_custom_call.1} parent=1 // pred_fallthru
      _
    // Predicated region
    $region6: #{tpu_custom_call.1} parent=1 // pred_check
      _
    $region7: #{tpu_custom_call.1} parent=1 // pred_check_branch
      %33 = sbr.rel (0) target = $region9
    $region8: #{tpu_custom_call.1} parent=1 // pred_region
      %35 = vsyncadd [#allocation8], 0
      %s37 = sshll.u32 %s1, 4
      %s38 = int_to_ptr.hbm [resolvable:$true] %s37
      %s39 = sshll.u32 [#allocation7], 4
      %s40 = int_to_ptr.vmem [resolvable:$true] %s39
      %42 = dma.hbm_to_vmem [thread:$0]  %s38, 128, %s40, [#allocation8]
    $region9: #{tpu_custom_call.1} parent=1 // pred_fallthru
      _
    // Predicated region
    $region10: #{tpu_custom_call.1} parent=1 // pred_check
      _
    $region11: #{tpu_custom_call.1} parent=1 // pred_check_branch
      %44 = sbr.rel (0) target = $region13
    $region12: #{tpu_custom_call.1} parent=1 // pred_region
      %46 = vsyncadd [#allocation8], 0
      %s47 = sshll.u32 %s2, 4
      %s48 = int_to_ptr.hbm [resolvable:$true] %s47
      %s49 = sshll.u32 [#allocation9], 4
      %s50 = int_to_ptr.vmem [resolvable:$true] %s49
      %55 = dma.hbm_to_vmem [thread:$0]  %s48, 2048, %s50, [#allocation8], 128, 128, 8
    $region13: #{tpu_custom_call.1} parent=1 // pred_fallthru
      _
    // Predicated region
    $region14: #{tpu_custom_call.1} parent=1 // pred_check
      _
    $region15: #{tpu_custom_call.1} parent=1 // pred_check_branch
      %57 = sbr.rel (0) target = $region17
    $region16: #{tpu_custom_call.1} parent=1 // pred_region
      %59 = vsyncadd [#allocation11], 0
      %s60 = sshll.u32 %s3, 4
      %s61 = int_to_ptr.hbm [resolvable:$true] %s60
      %s62 = sshll.u32 [#allocation10], 4
      %s63 = int_to_ptr.vmem [resolvable:$true] %s62
      %68 = dma.hbm_to_vmem [thread:$0]  %s61, 2048, %s63, [#allocation11], 128, 128, 8
    $region17: #{tpu_custom_call.1} parent=1 // pred_fallthru
      _
    // Predicated region
    $region18: #{tpu_custom_call.1} parent=1 // pred_check
      _
    $region19: #{tpu_custom_call.1} parent=1 // pred_check_branch
      %70 = sbr.rel (0) target = $region21
    $region20: #{tpu_custom_call.1} parent=1 // pred_region
      _
    $region21: #{tpu_custom_call.1} parent=1 // pred_fallthru
      _
    // Predicated region
    $region22: #{tpu_custom_call.1} parent=1 // pred_check
      _
    $region23: #{tpu_custom_call.1} parent=1 // pred_check_branch
      %72 = sbr.rel (0) target = $region25
    $region24: #{tpu_custom_call.1} parent=1 // pred_region
      %74 = vsyncadd [#allocation11], 0
      %s75 = sshll.u32 %s5, 4
      %s76 = int_to_ptr.hbm [resolvable:$true] %s75
      %s77 = sshll.u32 [#allocation12], 4
      %s78 = int_to_ptr.vmem [resolvable:$true] %s77
      %83 = dma.hbm_to_vmem [thread:$0]  %s76, 2048, %s78, [#allocation11], 128, 128, 8
    $region25: #{tpu_custom_call.1} parent=1 // pred_fallthru
      _
    // Predicated region
    $region26: #{tpu_custom_call.1} parent=1 // pred_check
      _
    $region27: #{tpu_custom_call.1} parent=1 // pred_check_branch
      %85 = sbr.rel (0) target = $region29
    $region28: #{tpu_custom_call.1} parent=1 // pred_region
      _
    $region29: #{tpu_custom_call.1} parent=1 // pred_fallthru
      _
    // Predicated region
    $region30: #{tpu_custom_call.1} parent=1 // pred_check
      _
    $region31: #{tpu_custom_call.1} parent=1 // pred_check_branch
      %87 = sbr.rel (0) target = $region33
    $region32: #{tpu_custom_call.1} parent=1 // pred_region
      %89 = dma.done [#allocation5], 1024
    $region33: #{tpu_custom_call.1} parent=1 // pred_fallthru
      _
    // Predicated region
    $region34: #{tpu_custom_call.1} parent=1 // pred_check
      _
    $region35: #{tpu_custom_call.1} parent=1 // pred_check_branch
      %91 = sbr.rel (0) target = $region37
    $region36: #{tpu_custom_call.1} parent=1 // pred_region
      %93 = dma.done [#allocation8], 128
    $region37: #{tpu_custom_call.1} parent=1 // pred_fallthru
      _
    // Predicated region
    $region38: #{tpu_custom_call.1} parent=1 // pred_check
      _
    $region39: #{tpu_custom_call.1} parent=1 // pred_check_branch
      %95 = sbr.rel (0) target = $region41
    $region40: #{tpu_custom_call.1} parent=1 // pred_region
      %97 = dma.done [#allocation8], 2048
    $region41: #{tpu_custom_call.1} parent=1 // pred_fallthru
      _
    // Predicated region
    $region42: #{tpu_custom_call.1} parent=1 // pred_check
      _
    $region43: #{tpu_custom_call.1} parent=1 // pred_check_branch
      %99 = sbr.rel (0) target = $region45
    $region44: #{tpu_custom_call.1} parent=1 // pred_region
      %101 = dma.done [#allocation11], 2048
    $region45: #{tpu_custom_call.1} parent=1 // pred_fallthru
      _
    // Predicated region
    $region46: #{tpu_custom_call.1} parent=1 // pred_check
      _
    $region47: #{tpu_custom_call.1} parent=1 // pred_check_branch
      %103 = sbr.rel (0) target = $region49
    $region48: #{tpu_custom_call.1} parent=1 // pred_region
      %105 = dma.done [#allocation11], 2048
    $region49: #{tpu_custom_call.1} parent=1 // pred_fallthru
      _
    %v106 = vld [vmem:[#allocation4] sm:$0xff]
    %v107 = vld [vmem:[#allocation4 + $0x8] sm:$0xff]
    %v108 = vld [vmem:[#allocation4 + $0x10] sm:$0xff]
    %v109 = vld [vmem:[#allocation4 + $0x18] sm:$0xff]
    %v110 = vld [vmem:[#allocation4 + $0x20] sm:$0xff]
    %v111 = vld [vmem:[#allocation4 + $0x28] sm:$0xff]
    %v112 = vld [vmem:[#allocation4 + $0x30] sm:$0xff]
    %v113 = vld [vmem:[#allocation4 + $0x38] sm:$0xff]
    %v114 = vld [vmem:[#allocation9] sm:$0xff]
    %v115 = vld [vmem:[#allocation9 + $0x8] sm:$0xff]
    %v116 = vld [vmem:[#allocation9 + $0x10] sm:$0xff]
    %v117 = vld [vmem:[#allocation9 + $0x18] sm:$0xff]
    %v118 = vld [vmem:[#allocation9 + $0x20] sm:$0xff]
    %v119 = vld [vmem:[#allocation9 + $0x28] sm:$0xff]
    %v120 = vld [vmem:[#allocation9 + $0x30] sm:$0xff]
    %v121 = vld [vmem:[#allocation9 + $0x38] sm:$0xff]
    %v122 = vld [vmem:[#allocation9 + $0x40] sm:$0xff]
    %v123 = vld [vmem:[#allocation9 + $0x48] sm:$0xff]
    %v124 = vld [vmem:[#allocation9 + $0x50] sm:$0xff]
    %v125 = vld [vmem:[#allocation9 + $0x58] sm:$0xff]
    %v126 = vld [vmem:[#allocation9 + $0x60] sm:$0xff]
    %v127 = vld [vmem:[#allocation9 + $0x68] sm:$0xff]
    %v128 = vld [vmem:[#allocation9 + $0x70] sm:$0xff]
    %v129 = vld [vmem:[#allocation9 + $0x78] sm:$0xff]
    %v130 = vld [vmem:[%s4] sm:$0x1]
    %v132 = vperm.slane %v130, 0
    %134 = vmatpush.msra.mxu0 %v129
    %135 = vmatpush.msra.mxu0 %v128
    %136 = vmatpush.msra.mxu0 %v127
    %137 = vmatpush.msra.mxu0 %v126
    %138 = vmatpush.msra.mxu0 %v125
    %139 = vmatpush.msra.mxu0 %v124
    %140 = vmatpush.msra.mxu0 %v123
    %141 = vmatpush.msra.mxu0 %v122
    %142 = vmatpush.msra.mxu0 %v121
    %143 = vmatpush.msra.mxu0 %v120
    %144 = vmatpush.msra.mxu0 %v119
    %145 = vmatpush.msra.mxu0 %v118
    %146 = vmatpush.msra.mxu0 %v117
    %147 = vmatpush.msra.mxu0 %v116
    %148 = vmatpush.msra.mxu0 %v115
    %149 = vmatpush.msra.mxu0 %v114
    %150 = vmatmul.f32.gmra.mxu0 %v106
    %v151 = vpop.f32.mrf.mxu0
    %v152 = vadd.f32 %v132, %v151
    %153 = vmatmul.f32.gmra.mxu0 %v107
    %v154 = vpop.f32.mrf.mxu0
    %v155 = vadd.f32 %v132, %v154
    %156 = vmatmul.f32.gmra.mxu0 %v108
    %v157 = vpop.f32.mrf.mxu0
    %v158 = vadd.f32 %v132, %v157
    %159 = vmatmul.f32.gmra.mxu0 %v109
    %v160 = vpop.f32.mrf.mxu0
    %v161 = vadd.f32 %v132, %v160
    %162 = vmatmul.f32.gmra.mxu0 %v110
    %v163 = vpop.f32.mrf.mxu0
    %v164 = vadd.f32 %v132, %v163
    %165 = vmatmul.f32.gmra.mxu0 %v111
    %v166 = vpop.f32.mrf.mxu0
    %v167 = vadd.f32 %v132, %v166
    %168 = vmatmul.f32.gmra.mxu0 %v112
    %v169 = vpop.f32.mrf.mxu0
    %v170 = vadd.f32 %v132, %v169
    %171 = vmatmul.f32.gmra.mxu0 %v113
    %v172 = vpop.f32.mrf.mxu0
    %v173 = vadd.f32 %v132, %v172
    %174 = vdwg.mxu0
    %175 = vst [vmem:[#allocation2] sm:$0xff] %v152
    %176 = vst [vmem:[#allocation2 + $0x8] sm:$0xff] %v155
    %177 = vst [vmem:[#allocation2 + $0x10] sm:$0xff] %v158
    %178 = vst [vmem:[#allocation2 + $0x18] sm:$0xff] %v161
    %179 = vst [vmem:[#allocation2 + $0x20] sm:$0xff] %v164
    %180 = vst [vmem:[#allocation2 + $0x28] sm:$0xff] %v167
    %181 = vst [vmem:[#allocation2 + $0x30] sm:$0xff] %v170
    %182 = vst [vmem:[#allocation2 + $0x38] sm:$0xff] %v173
    %v183 = vld [vmem:[#allocation10] sm:$0xff]
    %v184 = vld [vmem:[#allocation10 + $0x8] sm:$0xff]
    %v185 = vld [vmem:[#allocation10 + $0x10] sm:$0xff]
    %v186 = vld [vmem:[#allocation10 + $0x18] sm:$0xff]
    %v187 = vld [vmem:[#allocation10 + $0x20] sm:$0xff]
    %v188 = vld [vmem:[#allocation10 + $0x28] sm:$0xff]
    %v189 = vld [vmem:[#allocation10 + $0x30] sm:$0xff]
    %v190 = vld [vmem:[#allocation10 + $0x38] sm:$0xff]
    %v191 = vld [vmem:[#allocation10 + $0x40] sm:$0xff]
    %v192 = vld [vmem:[#allocation10 + $0x48] sm:$0xff]
    %v193 = vld [vmem:[#allocation10 + $0x50] sm:$0xff]
    %v194 = vld [vmem:[#allocation10 + $0x58] sm:$0xff]
    %v195 = vld [vmem:[#allocation10 + $0x60] sm:$0xff]
    %v196 = vld [vmem:[#allocation10 + $0x68] sm:$0xff]
    %v197 = vld [vmem:[#allocation10 + $0x70] sm:$0xff]
    %v198 = vld [vmem:[#allocation10 + $0x78] sm:$0xff]
    %v199 = vld [vmem:[#allocation7] sm:$0xff]
    %v200 = vld [vmem:[#allocation2] sm:$0xff]
    %201 = vmatpush.msra.mxu0 %v198
    %202 = vmatpush.msra.mxu0 %v197
    %203 = vmatpush.msra.mxu0 %v196
    %204 = vmatpush.msra.mxu0 %v195
    %205 = vmatpush.msra.mxu0 %v194
    %206 = vmatpush.msra.mxu0 %v193
    %207 = vmatpush.msra.mxu0 %v192
    %208 = vmatpush.msra.mxu0 %v191
    %209 = vmatpush.msra.mxu0 %v190
    %210 = vmatpush.msra.mxu0 %v189
    %211 = vmatpush.msra.mxu0 %v188
    %212 = vmatpush.msra.mxu0 %v187
    %213 = vmatpush.msra.mxu0 %v186
    %214 = vmatpush.msra.mxu0 %v185
    %215 = vmatpush.msra.mxu0 %v184
    %216 = vmatpush.msra.mxu0 %v183
    %217 = vmatmul.f32.gmra.mxu0 %v199
    %v218 = vpop.f32.mrf.mxu0
    %v219 = vadd.f32 0.0, %v218
    %220 = vdwg.mxu0
    %v221 = vadd.f32 %v200, %v219
    %v222 = vtanh.pop %v221
    %223 = vst [vmem:[#allocation3] sm:$0xff] %v222
    %s224 = scalar_lea.vmem [#allocation2], 8
    %v225 = vld [vmem:[%s224] sm:$0xff]
    %226 = vmatpush.msra.mxu0 %v198
    %227 = vmatpush.msra.mxu0 %v197
    %228 = vmatpush.msra.mxu0 %v196
    %229 = vmatpush.msra.mxu0 %v195
    %230 = vmatpush.msra.mxu0 %v194
    %231 = vmatpush.msra.mxu0 %v193
    %232 = vmatpush.msra.mxu0 %v192
    %233 = vmatpush.msra.mxu0 %v191
    %234 = vmatpush.msra.mxu0 %v190
    %235 = vmatpush.msra.mxu0 %v189
    %236 = vmatpush.msra.mxu0 %v188
    %237 = vmatpush.msra.mxu0 %v187
    %238 = vmatpush.msra.mxu0 %v186
    %239 = vmatpush.msra.mxu0 %v185
    %240 = vmatpush.msra.mxu0 %v184
    %241 = vmatpush.msra.mxu0 %v183
    %242 = vmatmul.f32.gmra.mxu0 %v222
    %v243 = vpop.f32.mrf.mxu0
    %v244 = vadd.f32 0.0, %v243
    %245 = vdwg.mxu0
    %v246 = vadd.f32 %v225, %v244
    %v247 = vtanh.pop %v246
    %s248 = scalar_lea.vmem [#allocation3], 8
    %249 = vst [vmem:[%s248] sm:$0xff] %v247
    %s250 = scalar_lea.vmem [#allocation2], 16
    %v251 = vld [vmem:[%s250] sm:$0xff]
    %252 = vmatpush.msra.mxu0 %v198
    %253 = vmatpush.msra.mxu0 %v197
    %254 = vmatpush.msra.mxu0 %v196
    %255 = vmatpush.msra.mxu0 %v195
    %256 = vmatpush.msra.mxu0 %v194
    %257 = vmatpush.msra.mxu0 %v193
    %258 = vmatpush.msra.mxu0 %v192
    %259 = vmatpush.msra.mxu0 %v191
    %260 = vmatpush.msra.mxu0 %v190
    %261 = vmatpush.msra.mxu0 %v189
    %262 = vmatpush.msra.mxu0 %v188
    %263 = vmatpush.msra.mxu0 %v187
    %264 = vmatpush.msra.mxu0 %v186
    %265 = vmatpush.msra.mxu0 %v185
    %266 = vmatpush.msra.mxu0 %v184
    %267 = vmatpush.msra.mxu0 %v183
    %268 = vmatmul.f32.gmra.mxu0 %v247
    %v269 = vpop.f32.mrf.mxu0
    %v270 = vadd.f32 0.0, %v269
    %271 = vdwg.mxu0
    %v272 = vadd.f32 %v251, %v270
    %v273 = vtanh.pop %v272
    %s274 = scalar_lea.vmem [#allocation3], 16
    %275 = vst [vmem:[%s274] sm:$0xff] %v273
    %s276 = scalar_lea.vmem [#allocation2], 24
    %v277 = vld [vmem:[%s276] sm:$0xff]
    %278 = vmatpush.msra.mxu0 %v198
    %279 = vmatpush.msra.mxu0 %v197
    %280 = vmatpush.msra.mxu0 %v196
    %281 = vmatpush.msra.mxu0 %v195
    %282 = vmatpush.msra.mxu0 %v194
    %283 = vmatpush.msra.mxu0 %v193
    %284 = vmatpush.msra.mxu0 %v192
    %285 = vmatpush.msra.mxu0 %v191
    %286 = vmatpush.msra.mxu0 %v190
    %287 = vmatpush.msra.mxu0 %v189
    %288 = vmatpush.msra.mxu0 %v188
    %289 = vmatpush.msra.mxu0 %v187
    %290 = vmatpush.msra.mxu0 %v186
    %291 = vmatpush.msra.mxu0 %v185
    %292 = vmatpush.msra.mxu0 %v184
    %293 = vmatpush.msra.mxu0 %v183
    %294 = vmatmul.f32.gmra.mxu0 %v273
    %v295 = vpop.f32.mrf.mxu0
    %v296 = vadd.f32 0.0, %v295
    %297 = vdwg.mxu0
    %v298 = vadd.f32 %v277, %v296
    %v299 = vtanh.pop %v298
    %s300 = scalar_lea.vmem [#allocation3], 24
    %301 = vst [vmem:[%s300] sm:$0xff] %v299
    %s302 = scalar_lea.vmem [#allocation2], 32
    %v303 = vld [vmem:[%s302] sm:$0xff]
    %304 = vmatpush.msra.mxu0 %v198
    %305 = vmatpush.msra.mxu0 %v197
    %306 = vmatpush.msra.mxu0 %v196
    %307 = vmatpush.msra.mxu0 %v195
    %308 = vmatpush.msra.mxu0 %v194
    %309 = vmatpush.msra.mxu0 %v193
    %310 = vmatpush.msra.mxu0 %v192
    %311 = vmatpush.msra.mxu0 %v191
    %312 = vmatpush.msra.mxu0 %v190
    %313 = vmatpush.msra.mxu0 %v189
    %314 = vmatpush.msra.mxu0 %v188
    %315 = vmatpush.msra.mxu0 %v187
    %316 = vmatpush.msra.mxu0 %v186
    %317 = vmatpush.msra.mxu0 %v185
    %318 = vmatpush.msra.mxu0 %v184
    %319 = vmatpush.msra.mxu0 %v183
    %320 = vmatmul.f32.gmra.mxu0 %v299
    %v321 = vpop.f32.mrf.mxu0
    %v322 = vadd.f32 0.0, %v321
    %323 = vdwg.mxu0
    %v324 = vadd.f32 %v303, %v322
    %v325 = vtanh.pop %v324
    %s326 = scalar_lea.vmem [#allocation3], 32
    %327 = vst [vmem:[%s326] sm:$0xff] %v325
    %s328 = scalar_lea.vmem [#allocation2], 40
    %v329 = vld [vmem:[%s328] sm:$0xff]
    %330 = vmatpush.msra.mxu0 %v198
    %331 = vmatpush.msra.mxu0 %v197
    %332 = vmatpush.msra.mxu0 %v196
    %333 = vmatpush.msra.mxu0 %v195
    %334 = vmatpush.msra.mxu0 %v194
    %335 = vmatpush.msra.mxu0 %v193
    %336 = vmatpush.msra.mxu0 %v192
    %337 = vmatpush.msra.mxu0 %v191
    %338 = vmatpush.msra.mxu0 %v190
    %339 = vmatpush.msra.mxu0 %v189
    %340 = vmatpush.msra.mxu0 %v188
    %341 = vmatpush.msra.mxu0 %v187
    %342 = vmatpush.msra.mxu0 %v186
    %343 = vmatpush.msra.mxu0 %v185
    %344 = vmatpush.msra.mxu0 %v184
    %345 = vmatpush.msra.mxu0 %v183
    %346 = vmatmul.f32.gmra.mxu0 %v325
    %v347 = vpop.f32.mrf.mxu0
    %v348 = vadd.f32 0.0, %v347
    %349 = vdwg.mxu0
    %v350 = vadd.f32 %v329, %v348
    %v351 = vtanh.pop %v350
    %s352 = scalar_lea.vmem [#allocation3], 40
    %353 = vst [vmem:[%s352] sm:$0xff] %v351
    %s354 = scalar_lea.vmem [#allocation2], 48
    %v355 = vld [vmem:[%s354] sm:$0xff]
    %356 = vmatpush.msra.mxu0 %v198
    %357 = vmatpush.msra.mxu0 %v197
    %358 = vmatpush.msra.mxu0 %v196
    %359 = vmatpush.msra.mxu0 %v195
    %360 = vmatpush.msra.mxu0 %v194
    %361 = vmatpush.msra.mxu0 %v193
    %362 = vmatpush.msra.mxu0 %v192
    %363 = vmatpush.msra.mxu0 %v191
    %364 = vmatpush.msra.mxu0 %v190
    %365 = vmatpush.msra.mxu0 %v189
    %366 = vmatpush.msra.mxu0 %v188
    %367 = vmatpush.msra.mxu0 %v187
    %368 = vmatpush.msra.mxu0 %v186
    %369 = vmatpush.msra.mxu0 %v185
    %370 = vmatpush.msra.mxu0 %v184
    %371 = vmatpush.msra.mxu0 %v183
    %372 = vmatmul.f32.gmra.mxu0 %v351
    %v373 = vpop.f32.mrf.mxu0
    %v374 = vadd.f32 0.0, %v373
    %375 = vdwg.mxu0
    %v376 = vadd.f32 %v355, %v374
    %v377 = vtanh.pop %v376
    %s378 = scalar_lea.vmem [#allocation3], 48
    %379 = vst [vmem:[%s378] sm:$0xff] %v377
    %s380 = scalar_lea.vmem [#allocation2], 56
    %v381 = vld [vmem:[%s380] sm:$0xff]
    %382 = vmatpush.msra.mxu0 %v198
    %383 = vmatpush.msra.mxu0 %v197
    %384 = vmatpush.msra.mxu0 %v196
    %385 = vmatpush.msra.mxu0 %v195
    %386 = vmatpush.msra.mxu0 %v194
    %387 = vmatpush.msra.mxu0 %v193
    %388 = vmatpush.msra.mxu0 %v192
    %389 = vmatpush.msra.mxu0 %v191
    %390 = vmatpush.msra.mxu0 %v190
    %391 = vmatpush.msra.mxu0 %v189
    %392 = vmatpush.msra.mxu0 %v188
    %393 = vmatpush.msra.mxu0 %v187
    %394 = vmatpush.msra.mxu0 %v186
    %395 = vmatpush.msra.mxu0 %v185
    %396 = vmatpush.msra.mxu0 %v184
    %397 = vmatpush.msra.mxu0 %v183
    %398 = vmatmul.f32.gmra.mxu0 %v377
    %v399 = vpop.f32.mrf.mxu0
    %v400 = vadd.f32 0.0, %v399
    %401 = vdwg.mxu0
    %v402 = vadd.f32 %v381, %v400
    %v403 = vtanh.pop %v402
    %s404 = scalar_lea.vmem [#allocation3], 56
    %405 = vst [vmem:[%s404] sm:$0xff] %v403
    %406 = vst [vmem:[#allocation14] sm:$0xff] %v403
    %v407 = vld [vmem:[#allocation3] sm:$0xff]
    %v408 = vld [vmem:[#allocation3 + $0x8] sm:$0xff]
    %v409 = vld [vmem:[#allocation3 + $0x10] sm:$0xff]
    %v410 = vld [vmem:[#allocation3 + $0x18] sm:$0xff]
    %v411 = vld [vmem:[#allocation3 + $0x20] sm:$0xff]
    %v412 = vld [vmem:[#allocation3 + $0x28] sm:$0xff]
    %v413 = vld [vmem:[#allocation3 + $0x30] sm:$0xff]
    %v414 = vld [vmem:[#allocation3 + $0x38] sm:$0xff]
    %v415 = vld [vmem:[#allocation12] sm:$0xff]
    %v416 = vld [vmem:[#allocation12 + $0x8] sm:$0xff]
    %v417 = vld [vmem:[#allocation12 + $0x10] sm:$0xff]
    %v418 = vld [vmem:[#allocation12 + $0x18] sm:$0xff]
    %v419 = vld [vmem:[#allocation12 + $0x20] sm:$0xff]
    %v420 = vld [vmem:[#allocation12 + $0x28] sm:$0xff]
    %v421 = vld [vmem:[#allocation12 + $0x30] sm:$0xff]
    %v422 = vld [vmem:[#allocation12 + $0x38] sm:$0xff]
    %v423 = vld [vmem:[#allocation12 + $0x40] sm:$0xff]
    %v424 = vld [vmem:[#allocation12 + $0x48] sm:$0xff]
    %v425 = vld [vmem:[#allocation12 + $0x50] sm:$0xff]
    %v426 = vld [vmem:[#allocation12 + $0x58] sm:$0xff]
    %v427 = vld [vmem:[#allocation12 + $0x60] sm:$0xff]
    %v428 = vld [vmem:[#allocation12 + $0x68] sm:$0xff]
    %v429 = vld [vmem:[#allocation12 + $0x70] sm:$0xff]
    %v430 = vld [vmem:[#allocation12 + $0x78] sm:$0xff]
    %v431 = vld [vmem:[%s6] sm:$0x1]
    %v433 = vperm.slane %v431, 0
    %435 = vmatpush.msra.mxu0 %v430
    %436 = vmatpush.msra.mxu0 %v429
    %437 = vmatpush.msra.mxu0 %v428
    %438 = vmatpush.msra.mxu0 %v427
    %439 = vmatpush.msra.mxu0 %v426
    %440 = vmatpush.msra.mxu0 %v425
    %441 = vmatpush.msra.mxu0 %v424
    %442 = vmatpush.msra.mxu0 %v423
    %443 = vmatpush.msra.mxu0 %v422
    %444 = vmatpush.msra.mxu0 %v421
    %445 = vmatpush.msra.mxu0 %v420
    %446 = vmatpush.msra.mxu0 %v419
    %447 = vmatpush.msra.mxu0 %v418
    %448 = vmatpush.msra.mxu0 %v417
    %449 = vmatpush.msra.mxu0 %v416
    %450 = vmatpush.msra.mxu0 %v415
    %451 = vmatmul.f32.gmra.mxu0 %v407
    %v452 = vpop.f32.mrf.mxu0
    %v453 = vadd.f32 %v433, %v452
    %454 = vmatmul.f32.gmra.mxu0 %v408
    %v455 = vpop.f32.mrf.mxu0
    %v456 = vadd.f32 %v433, %v455
    %457 = vmatmul.f32.gmra.mxu0 %v409
    %v458 = vpop.f32.mrf.mxu0
    %v459 = vadd.f32 %v433, %v458
    %460 = vmatmul.f32.gmra.mxu0 %v410
    %v461 = vpop.f32.mrf.mxu0
    %v462 = vadd.f32 %v433, %v461
    %463 = vmatmul.f32.gmra.mxu0 %v411
    %v464 = vpop.f32.mrf.mxu0
    %v465 = vadd.f32 %v433, %v464
    %466 = vmatmul.f32.gmra.mxu0 %v412
    %v467 = vpop.f32.mrf.mxu0
    %v468 = vadd.f32 %v433, %v467
    %469 = vmatmul.f32.gmra.mxu0 %v413
    %v470 = vpop.f32.mrf.mxu0
    %v471 = vadd.f32 %v433, %v470
    %472 = vmatmul.f32.gmra.mxu0 %v414
    %v473 = vpop.f32.mrf.mxu0
    %v474 = vadd.f32 %v433, %v473
    %475 = vdwg.mxu0
    %476 = vst [vmem:[#allocation13] sm:$0xff] %v453
    %477 = vst [vmem:[#allocation13 + $0x8] sm:$0xff] %v456
    %478 = vst [vmem:[#allocation13 + $0x10] sm:$0xff] %v459
    %479 = vst [vmem:[#allocation13 + $0x18] sm:$0xff] %v462
    %480 = vst [vmem:[#allocation13 + $0x20] sm:$0xff] %v465
    %481 = vst [vmem:[#allocation13 + $0x28] sm:$0xff] %v468
    %482 = vst [vmem:[#allocation13 + $0x30] sm:$0xff] %v471
    %483 = vst [vmem:[#allocation13 + $0x38] sm:$0xff] %v474
    // Predicated region
    $region50: #{tpu_custom_call.1} parent=1 // pred_check
      _
    $region51: #{tpu_custom_call.1} parent=1 // pred_check_branch
      %485 = sbr.rel (0) target = $region53
    $region52: #{tpu_custom_call.1} parent=1 // pred_region
      %487 = vsyncadd [#allocation6], 0
      %s488 = sshll.u32 [#allocation13], 4
      %s489 = int_to_ptr.vmem [resolvable:$true] %s488
      %s490 = sshll.u32 %s7, 4
      %s491 = int_to_ptr.hbm [resolvable:$true] %s490
      %496 = dma.vmem_to_hbm [thread:$0]  %s489, 1024, %s491, [#allocation6], 128, 128, 8
    $region53: #{tpu_custom_call.1} parent=1 // pred_fallthru
      _
    // Predicated region
    $region54: #{tpu_custom_call.1} parent=1 // pred_check
      _
    $region55: #{tpu_custom_call.1} parent=1 // pred_check_branch
      %498 = sbr.rel (0) target = $region57
    $region56: #{tpu_custom_call.1} parent=1 // pred_region
      %500 = vsyncadd [#allocation15], 0
      %s502 = sshll.u32 [#allocation14], 4
      %s503 = int_to_ptr.vmem [resolvable:$true] %s502
      %s504 = sshll.u32 %s8, 4
      %s505 = int_to_ptr.hbm [resolvable:$true] %s504
      %507 = dma.vmem_to_hbm [thread:$0]  %s503, 128, %s505, [#allocation15]
    $region57: #{tpu_custom_call.1} parent=1 // pred_fallthru
      _
    // Predicated region
    $region58: #{tpu_custom_call.1} parent=1 // pred_check
      _
    $region59: #{tpu_custom_call.1} parent=1 // pred_check_branch
      %509 = sbr.rel (0) target = $region61
    $region60: #{tpu_custom_call.1} parent=1 // pred_region
      %511 = dma.done [#allocation6], 1024
    $region61: #{tpu_custom_call.1} parent=1 // pred_fallthru
      _
    // Predicated region
    $region62: #{tpu_custom_call.1} parent=1 // pred_check
      _
    $region63: #{tpu_custom_call.1} parent=1 // pred_check_branch
      %513 = sbr.rel (0) target = $region65
    $region64: #{tpu_custom_call.1} parent=1 // pred_region
      %515 = dma.done [#allocation15], 128
    $region65: #{tpu_custom_call.1} parent=1 // pred_fallthru
      _
    %516 = vsyncpa [#allocation5], 1
    %517 = vsyncpa [#allocation8], 1
    %518 = vsyncpa [#allocation11], 1
    %519 = vsyncpa [#allocation6], 1
    %520 = vsyncpa [#allocation15], 1

</llo_original>
